<compile_context>
chip_gen: v6e
topology: v6e:2x2x1
jax: 0.10.0
libtpu: 0.0.40
codegen_flags: <defaults>
</compile_context>

<pallas_src>
import jax
import jax.numpy as jnp
from jax.experimental import pallas as pl
from jax.experimental.pallas import tpu as pltpu

EPS = 1e-4  # matches self.epsilon in the PyTorch module


def _make_kernel(compute_dtype, matmul_dtype, out_dtype):
    def kernel(wn_ref, x0_ref, x1_ref, x2_ref, cw_ref, cb_ref, o_ref):
        # wn_ref: (3,) pre-normalized fusion weights in SMEM (f32 scalars).
        w0 = wn_ref[0].astype(compute_dtype)
        w1 = wn_ref[1].astype(compute_dtype)
        w2 = wn_ref[2].astype(compute_dtype)
        # Input tiles are (C1, tn): channels on sublanes, spatial on lanes.
        fused = (w0 * x0_ref[...].astype(compute_dtype)
                 + w1 * x1_ref[...].astype(compute_dtype)
                 + w2 * x2_ref[...].astype(compute_dtype))
        act = fused * jax.nn.sigmoid(fused)          # SiLU
        # 1x1 conv == channel contraction on the MXU: (C2, C1) @ (C1, tn).
        # cw_ref is already matmul_dtype (pre-cast once in the wrapper).
        out = jnp.dot(
            cw_ref[...],
            act.astype(matmul_dtype),
            preferred_element_type=jnp.float32,
        )
        o_ref[...] = (out + cb_ref[...]).astype(out_dtype)  # bias (C2,1) bcast over lanes

    return kernel


def _vmem_capacity_bytes():
    """Per-TensorCore VMEM capacity; conservative fallback if query unavailable."""
    try:
        return int(pltpu.get_tpu_info().vmem_capacity_bytes)
    except Exception:
        return 64 * 1024 * 1024  # v7x per-TC size — the tightest generation


def _pick_tile(hw, c1, c2, batch, *, in_bytes, out_bytes, max_tile, vmem_budget,
               min_steps=8):
    """Largest lane tile (multiple of 128) dividing HW whose double-buffered
    (3 inputs + 1 output) working set fits `vmem_budget`, while keeping at
    least `min_steps` total grid steps so DMA/compute overlap and both v7x
    TensorCores get work (no degenerate 1-step grid)."""
    if hw % 128 != 0:
        # Full-extent block is always legal; the ragged lanes cost masked vst.
        # TODO(synk): for small pyramid levels (e.g. 20x20=400, 10x10=100) have
        # the producer present a lane-dense (C1, B*HW) slab instead.
        return hw
    cands = [t for t in (8192, 4096, 2048, 1024, 512, 256, 128)
             if t <= max_tile and hw % t == 0]
    if not cands:
        return hw
    per_lane = 2 * (3 * c1 * in_bytes + c2 * out_bytes)  # double-buffered bytes/lane
    fitting = [t for t in cands if per_lane * t <= vmem_budget] or [cands[-1]]
    for t in fitting:                      # largest first
        if batch * (hw // t) >= min_steps:
            return t
    return fitting[-1]                     # HW too small: smallest tile -> most steps


def bifpn_add3(x0, x1, x2, w, conv_w, conv_b, *,
               io_dtype=jnp.bfloat16,       # dtype of the 3 inputs in HBM
               matmul_dtype=jnp.bfloat16,   # MXU operand dtype (f32 accumulation)
               compute_dtype=jnp.float32,   # weighted-sum + SiLU dtype (f32: v5e-safe)
               out_dtype=jnp.float32,       # output dtype (bf16 if consumer allows)
               max_tile=8192):
    """x0/x1/x2: (B, C1, H, W); w: (3,); conv_w: (C2, C1, 1, 1); conv_b: (C2,)."""
    B, C1, H, W = x0.shape
    C2 = conv_w.shape[0]
    HW = H * W

    in_bytes = jnp.dtype(io_dtype).itemsize
    out_bytes = jnp.dtype(out_dtype).itemsize
    mm_bytes = jnp.dtype(matmul_dtype).itemsize

    # Generation-aware VMEM ceiling: ~3/4 of per-TC capacity, never above 96 MiB
    # (=> ~48 MiB on v7x's 64 MiB/TC, up to 96 MiB on v5e/v6e's 128 MiB).
    vmem_cap_limit = min(3 * _vmem_capacity_bytes() // 4, 96 * 1024 * 1024)

    tn = _pick_tile(HW, C1, C2, B, in_bytes=in_bytes, out_bytes=out_bytes,
                    max_tile=max_tile, vmem_budget=vmem_cap_limit // 2)
    assert HW % tn == 0

    # Normalize fusion weights once (w / (sum(w) + eps), as in the module).
    w32 = w.astype(jnp.float32)
    wn = w32 / (jnp.sum(w32) + EPS)

    # Free reshapes: stay NCHW, flatten spatial onto the lane axis.  Inputs are
    # cast to io_dtype (bf16 by default) once here -> ~halves input HBM traffic.
    x0r = x0.reshape(B, C1, HW).astype(io_dtype)
    x1r = x1.reshape(B, C1, HW).astype(io_dtype)
    x2r = x2.reshape(B, C1, HW).astype(io_dtype)
    cw = conv_w.reshape(C2, C1).astype(matmul_dtype)  # pre-cast once, not per step
    cb = conv_b.reshape(C2, 1).astype(jnp.float32)    # added to the f32 accumulator

    grid = (B, HW // tn)

    # Double-buffered tiles + (still double-buffered) resident conv weight/bias.
    working = (2 * (3 * C1 * in_bytes + C2 * out_bytes) * tn
               + 2 * (C2 * C1 * mm_bytes + C2 * 4))
    vmem_limit = int(min(max(2 * working, 32 * 1024 * 1024), vmem_cap_limit))

    x_spec = pl.BlockSpec((None, C1, tn), lambda b, j: (b, 0, j))
    # TODO(synk): pipeline_mode=pl.Buffered(1) on the constant cw/cb specs would
    # drop their redundant second buffer; left at the default for robustness.

    out = pl.pallas_call(
        _make_kernel(compute_dtype, matmul_dtype, out_dtype),
        out_shape=jax.ShapeDtypeStruct((B, C2, HW), out_dtype),
        grid=grid,
        in_specs=[
            pl.BlockSpec(memory_space=pltpu.MemorySpace.SMEM),  # wn (3,) scalars
            x_spec,                                             # x0 tile (C1, tn)
            x_spec,                                             # x1 tile
            x_spec,                                             # x2 tile
            pl.BlockSpec((C2, C1), lambda b, j: (0, 0)),        # conv weight (resident)
            pl.BlockSpec((C2, 1), lambda b, j: (0, 0)),         # conv bias (resident)
        ],
        out_specs=pl.BlockSpec((None, C2, tn), lambda b, j: (b, 0, j)),
        compiler_params=pltpu.CompilerParams(
            dimension_semantics=("parallel", "parallel"),
            vmem_limit_bytes=vmem_limit,
        ),
    )(wn, x0r, x1r, x2r, cw, cb)

    return out.reshape(B, C2, H, W)  # free reshape back to NCHW


def reference(x0, x1, x2, w, conv_w, conv_b):
    weight = w / (jnp.sum(w) + EPS)
    fused = weight[0] * x0 + weight[1] * x1 + weight[2] * x2
    act = fused * jax.nn.sigmoid(fused)
    y = jnp.einsum(
        "bchw,oc->bohw", act, conv_w.reshape(conv_w.shape[0], -1),
        precision=jax.lax.Precision.HIGHEST,
    )
    return y + conv_b[None, :, None, None]


if __name__ == "__main__":
    B, C1, C2, H, W = 2, 4, 8, 16, 16

    key = jax.random.PRNGKey(0)
    k0, k1, k2, kw, kb = jax.random.split(key, 5)

    x0 = jax.random.normal(k0, (B, C1, H, W), dtype=jnp.float32)
    x1 = jax.random.normal(k1, (B, C1, H, W), dtype=jnp.float32)
    x2 = jax.random.normal(k2, (B, C1, H, W), dtype=jnp.float32)

    # nn.Parameter(torch.ones(3)) — deterministic init as in __init__
    w = jnp.ones((3,), dtype=jnp.float32)
    # Conv2d(c1, c2, k=1) params — deterministic synthetic init
    conv_w = 0.1 * jax.random.normal(kw, (C2, C1, 1, 1), dtype=jnp.float32)
    conv_b = 0.1 * jax.random.normal(kb, (C2,), dtype=jnp.float32)

    ref = reference(x0, x1, x2, w, conv_w, conv_b)

    # 1) Strict f32 end-to-end path (validation of structure / indexing).
    out_f32 = jax.block_until_ready(
        bifpn_add3(x0, x1, x2, w, conv_w, conv_b,
                   io_dtype=jnp.float32, matmul_dtype=jnp.float32))
    assert out_f32.shape == (B, C2, H, W)
    assert jnp.allclose(out_f32, ref, atol=1e-4, rtol=1e-4)

    # 2) Default fast path: bf16 inputs in HBM, bf16 MXU operands, f32 output.
    out = jax.block_until_ready(bifpn_add3(x0, x1, x2, w, conv_w, conv_b))
    assert out.shape == (B, C2, H, W)
    assert out.dtype == jnp.float32
    assert jnp.allclose(out, ref, atol=3e-2, rtol=3e-2)

    # 3) Fully bf16-I/O path (use when the downstream consumer accepts bf16).
    out_bf16 = jax.block_until_ready(
        bifpn_add3(x0, x1, x2, w, conv_w, conv_b, out_dtype=jnp.bfloat16))
    assert out_bf16.dtype == jnp.bfloat16
    assert jnp.allclose(out_bf16.astype(jnp.float32), ref, atol=6e-2, rtol=6e-2)

    print("KERNEL_OK")
</pallas_src>

<mosaic_0001>
module attributes {stable_mosaic.version = 11 : i64} {
  func.func @kernel(%arg0: i32, %arg1: i32, %arg2: memref<3xf32, #tpu.memory_space<smem>>, %arg3: memref<1x4x128xf32, #tpu.memory_space<vmem>>, %arg4: memref<1x4x128xf32, #tpu.memory_space<vmem>>, %arg5: memref<1x4x128xf32, #tpu.memory_space<vmem>>, %arg6: memref<8x4xf32, #tpu.memory_space<vmem>>, %arg7: memref<8x1xf32, #tpu.memory_space<vmem>>, %arg8: memref<1x8x128xf32, #tpu.memory_space<vmem>>) attributes {dimension_semantics = [#tpu.dimension_semantics<parallel>, #tpu.dimension_semantics<parallel>], iteration_bounds = array<i64: 2, 2>, scalar_prefetch = 0 : i64, scratch_operands = 0 : i64, tpu.core_type = #tpu.core_type<tc>, window_params = [{transform_indices = @transform_0, window_bounds = array<i64: 3>}, {transform_indices = @transform_1, window_bounds = array<i64: 1, 4, 128>}, {transform_indices = @transform_2, window_bounds = array<i64: 1, 4, 128>}, {transform_indices = @transform_3, window_bounds = array<i64: 1, 4, 128>}, {pipeline_mode = #tpu.pipeline_mode<synchronous>, transform_indices = @transform_4, window_bounds = array<i64: 8, 4>}, {pipeline_mode = #tpu.pipeline_mode<synchronous>, transform_indices = @transform_5, window_bounds = array<i64: 8, 1>}, {transform_indices = @transform_6, window_bounds = array<i64: 1, 8, 128>}]} {
    %c0 = arith.constant 0 : index
    %0 = memref.load %arg2[%c0] : memref<3xf32, #tpu.memory_space<smem>>
    %c1 = arith.constant 1 : index
    %1 = memref.load %arg2[%c1] : memref<3xf32, #tpu.memory_space<smem>>
    %c2 = arith.constant 2 : index
    %2 = memref.load %arg2[%c2] : memref<3xf32, #tpu.memory_space<smem>>
    %c0_0 = arith.constant 0 : index
    %c0_1 = arith.constant 0 : index
    %c0_2 = arith.constant 0 : index
    %3 = vector.load %arg3[%c0_0, %c0_1, %c0_2] : memref<1x4x128xf32, #tpu.memory_space<vmem>>, vector<1x4x128xf32>
    %4 = vector.shape_cast %3 : vector<1x4x128xf32> to vector<4x128xf32>
    %5 = vector.broadcast %0 : f32 to vector<4x128xf32>
    %6 = arith.mulf %5, %4 : vector<4x128xf32>
    %c0_3 = arith.constant 0 : index
    %c0_4 = arith.constant 0 : index
    %c0_5 = arith.constant 0 : index
    %7 = vector.load %arg4[%c0_3, %c0_4, %c0_5] : memref<1x4x128xf32, #tpu.memory_space<vmem>>, vector<1x4x128xf32>
    %8 = vector.shape_cast %7 : vector<1x4x128xf32> to vector<4x128xf32>
    %9 = vector.broadcast %1 : f32 to vector<4x128xf32>
    %10 = arith.mulf %9, %8 : vector<4x128xf32>
    %11 = arith.addf %6, %10 : vector<4x128xf32>
    %c0_6 = arith.constant 0 : index
    %c0_7 = arith.constant 0 : index
    %c0_8 = arith.constant 0 : index
    %12 = vector.load %arg5[%c0_6, %c0_7, %c0_8] : memref<1x4x128xf32, #tpu.memory_space<vmem>>, vector<1x4x128xf32>
    %13 = vector.shape_cast %12 : vector<1x4x128xf32> to vector<4x128xf32>
    %14 = vector.broadcast %2 : f32 to vector<4x128xf32>
    %15 = arith.mulf %14, %13 : vector<4x128xf32>
    %16 = arith.addf %11, %15 : vector<4x128xf32>
    %17 = arith.negf %16 : vector<4x128xf32>
    %18 = math.exp %17 : vector<4x128xf32>
    %cst = arith.constant 1.000000e+00 : f32
    %19 = vector.broadcast %cst : f32 to vector<4x128xf32>
    %20 = arith.addf %19, %18 : vector<4x128xf32>
    %21 = arith.divf %19, %20 : vector<4x128xf32>
    %22 = arith.mulf %16, %21 : vector<4x128xf32>
    %c0_9 = arith.constant 0 : index
    %c0_10 = arith.constant 0 : index
    %23 = vector.load %arg6[%c0_9, %c0_10] : memref<8x4xf32, #tpu.memory_space<vmem>>, vector<8x4xf32>
    %cst_11 = arith.constant dense<0.000000e+00> : vector<8x128xf32>
    %24 = tpu.matmul %23, %22, %cst_11 {dimension_numbers = #tpu.dot_dimension_numbers<[1], [0], [0], [1], [0, 0, 1, 1], [], []>} : vector<8x4xf32>, vector<4x128xf32>, vector<8x128xf32> -> vector<8x128xf32>
    %c0_12 = arith.constant 0 : index
    %c0_13 = arith.constant 0 : index
    %25 = vector.load %arg7[%c0_12, %c0_13] : memref<8x1xf32, #tpu.memory_space<vmem>>, vector<8x1xf32>
    %26 = vector.broadcast %25 : vector<8x1xf32> to vector<8x128xf32>
    %27 = arith.addf %24, %26 : vector<8x128xf32>
    %c0_14 = arith.constant 0 : index
    %c0_15 = arith.constant 0 : index
    %c0_16 = arith.constant 0 : index
    %28 = vector.load %arg8[%c0_14, %c0_15, %c0_16] : memref<1x8x128xf32, #tpu.memory_space<vmem>>, vector<1x8x128xf32>
    %29 = vector.shape_cast %28 : vector<1x8x128xf32> to vector<8x128xf32>
    %30 = vector.shape_cast %27 : vector<8x128xf32> to vector<1x8x128xf32>
    tpu.vector_store %arg8[%c0_14, %c0_15, %c0_16], %30 {strides = array<i32>} : memref<1x8x128xf32, #tpu.memory_space<vmem>>, vector<1x8x128xf32>,
    return
  }
  func.func @transform_0(%arg0: i32, %arg1: i32) -> i32 {
    %c0_i32 = arith.constant 0 : i32
    %c0_i32_0 = arith.constant 0 : i32
    return %c0_i32 : i32
  }
  func.func @transform_1(%arg0: i32, %arg1: i32) -> (i32, i32, i32) {
    %c0_i32 = arith.constant 0 : i32
    %c0_i32_0 = arith.constant 0 : i32
    return %arg0, %c0_i32, %arg1 : i32, i32, i32
  }
  func.func @transform_2(%arg0: i32, %arg1: i32) -> (i32, i32, i32) {
    %c0_i32 = arith.constant 0 : i32
    %c0_i32_0 = arith.constant 0 : i32
    return %arg0, %c0_i32, %arg1 : i32, i32, i32
  }
  func.func @transform_3(%arg0: i32, %arg1: i32) -> (i32, i32, i32) {
    %c0_i32 = arith.constant 0 : i32
    %c0_i32_0 = arith.constant 0 : i32
    return %arg0, %c0_i32, %arg1 : i32, i32, i32
  }
  func.func @transform_4(%arg0: i32, %arg1: i32) -> (i32, i32) {
    %c0_i32 = arith.constant 0 : i32
    %c0_i32_0 = arith.constant 0 : i32
    %c0_i32_1 = arith.constant 0 : i32
    return %c0_i32, %c0_i32_0 : i32, i32
  }
  func.func @transform_5(%arg0: i32, %arg1: i32) -> (i32, i32) {
    %c0_i32 = arith.constant 0 : i32
    %c0_i32_0 = arith.constant 0 : i32
    %c0_i32_1 = arith.constant 0 : i32
    return %c0_i32, %c0_i32_0 : i32, i32
  }
  func.func @transform_6(%arg0: i32, %arg1: i32) -> (i32, i32, i32) {
    %c0_i32 = arith.constant 0 : i32
    %c0_i32_0 = arith.constant 0 : i32
    return %arg0, %c0_i32, %arg1 : i32, i32, i32
  }
}

</mosaic_0001>

<llo_original>
// kernel: tpu_custom_call.1
$region0: #{tpu_custom_call.1}
  #allocation0 [shape = 'u32[]', space=smem, size = 0x4, offset = 0x4, fixed_abs, tag = 'smem constant byte address 0x4 - core index']
  #allocation1 [shape = 'u32[144,128]{1,0:T(1,128)}', space=vmem, size = 0x12000, scoped, tag = 'internal scratch']
  %s0 = inlined_call_operand.vmem [shape: f32[3], index: 0, kind: input, shape index: {}]
  %s1 = inlined_call_operand.vmem [shape: f32[2,4,256], index: 1, kind: input, shape index: {}]
  %s2 = inlined_call_operand.hbm [shape: f32[2,4,256], index: 2, kind: input, shape index: {}]
  %s3 = inlined_call_operand.hbm [shape: f32[2,4,256], index: 3, kind: input, shape index: {}]
  %s4 = inlined_call_operand.vmem [shape: f32[8,4], index: 4, kind: input, shape index: {}]
  %s5 = inlined_call_operand.vmem [shape: f32[8,1], index: 5, kind: input, shape index: {}]
  %s6 = inlined_call_operand.hbm [shape: f32[2,8,256], index: 6, kind: output, shape index: {}]
  %s7 = sld [smem:[#allocation0]]
  $region69: #{tpu_custom_call.1} parent=0
    _
  %s9 = ssub.s32 1, %s7
  %s10 = scalar_select 0, %s9, %s7
  $region1: #{tpu_custom_call.1} parent=0
    #allocation2 [shape = 'u8[512]{0}', space=smem, size = 0x200, scoped, tag = 'input window, operand 0, single buffered']
    #allocation3 [shape = 's32[2]{0}', space=sflag, size = 0x8, scoped, tag = 'scoped memory for tpu_custom_call.1']
    #allocation4 [shape = 's32[2]{0}', space=sflag, size = 0x8, scoped, tag = 'scoped memory for tpu_custom_call.1']
    #allocation5 [shape = 's32[2]{0}', space=sflag, size = 0x8, scoped, tag = 'scoped memory for tpu_custom_call.1']
    #allocation6 [shape = 'u8[4096]{0}', space=vmem, size = 0x1000, scoped, tag = 'input window, operand 2']
    #allocation7 [shape = 'u8[4096]{0}', space=vmem, size = 0x1000, scoped, tag = 'input window, operand 3']
    #allocation8 [shape = 's32[2]{0}', space=sflag, size = 0x8, scoped, tag = 'scoped memory for tpu_custom_call.1']
    #allocation9 [shape = 'u8[8192]{0}', space=vmem, size = 0x2000, scoped, tag = 'output window, operand 0']
    %11 = vsyncpa [#allocation5], 0
    %12 = vsyncpa [#allocation3], 0
    %s13 = scalar_lea.sflag [#allocation3], 1
    %14 = vsyncpa %s13, 0
    %15 = vsyncpa [#allocation8], 0
    %s16 = scalar_lea.sflag [#allocation8], 1
    %17 = vsyncpa %s16, 0
    %18 = vsyncpa [#allocation4], 0
    %s19 = scalar_lea.sflag [#allocation4], 1
    %20 = vsyncpa %s19, 0
    loop: start=0, step=1, limit=6
    $region2: #{tpu_custom_call.1} parent=1 // loop_pre_header
      _
    $region3: #{tpu_custom_call.1} parent=1 // loop_header
      %s22 = sphi 0, %s26
      %p23 = scmp.ge.s32.totalorder %s22, 6
      %s29 = sphi 0, %s41
      %s30 = sphi 0, %s37
      %s31 = sphi 0, %s29
      %s32 = sphi 0, %s30
      %s33 = sphi 0, %s31
      %s34 = sphi 0, %s32
      %s42 = sphi 0, %s42
      %s44 = sphi 0, %s42
      %s45 = sphi 0, %s44
      %s59 = sphi 0, %s45
      %s67 = sphi 0, %s69
      %s70 = sphi 0, %s67
      %s71 = sphi 0, %s70
      %s87 = sphi 0, %s71
      %s95 = sphi 0, %s97
      %s98 = sphi 0, %s95
      %s99 = sphi 0, %s98
      %s115 = sphi 0, %s99
      %s123 = sphi 0, %s125
      %s126 = sphi 0, %s123
      %s127 = sphi 0, %s126
      %s143 = sphi 0, %s127
      %s147 = sphi 0, %s147
      %s149 = sphi 0, %s147
      %s150 = sphi 0, %s149
      %s164 = sphi 0, %s150
      %s168 = sphi 0, %s168
      %s170 = sphi 0, %s168
      %s171 = sphi 0, %s170
      %s185 = sphi 0, %s171
      %s193 = sphi 0, %s195
      %s196 = sphi 0, %s193
      %s197 = sphi 0, %s196
      %s213 = sphi 0, %s197
    $region4: #{tpu_custom_call.1} parent=1 // loop_header_branch
      %25 = sbr.rel (%p23) target = $region8
    $region5: #{tpu_custom_call.1} parent=1 // loop_body
      %s27 = ssub.s32 %s22, 1
      %s28 = ssub.s32 %s22, 2
      %s35 = sadd.s32 1, %s30
      %p36 = scmp.ge.s32.totalorder %s35, 2
      %s37 = scalar_select %p36, 0, %s35
      %s38 = sadd.s32 1, %s29
      %s39 = scalar_select %p36, %s38, %s29
      %p40 = scmp.ge.s32.totalorder %s39, 2
      %s41 = scalar_select %p40, 0, %s39
      %s43 = sadd.s32 %s42, 1
      %p46 = scmp.eq.s32.totalorder %s22, 3
      %p47 = scmp.ne.s32.totalorder %s42, %s44
      %p48 = scmp.eq.s32.totalorder %s22, 0
      %p49 = por %p47, %p48
      %p50 = scmp.ne.s32.totalorder %s42, %s44
      %p51 = scmp.eq.s32.totalorder %s27, 3
      %p52 = por %p50, %p51
      %p53 = scmp.ne.s32.totalorder %s44, %s45
      %p54 = scmp.eq.s32.totalorder %s27, 0
      %p55 = por %p53, %p54
      %p56 = scmp.ne.s32.totalorder %s44, %s45
      %p57 = scmp.eq.s32.totalorder %s28, 3
      %p58 = por %p56, %p57
      %p60 = scmp.ne.s32.totalorder %s45, %s59
      %p61 = scmp.eq.s32.totalorder %s28, 0
      %p62 = por %p60, %p61
      %s63 = ssub.s32 %s29, %s41
      %s64 = ssub.s32 %s30, %s37
      %s65 = sor.u32 %s63, %s64
      %p66 = scmp.eq.s32.totalorder %s65, 0
      %s68 = sadd.s32 %s67, 1
      %s69 = scalar_select %p66, %s67, %s68
      %p72 = pneg %p66
      %p73 = scmp.eq.s32.totalorder %s22, 3
      %p74 = por %p72, %p73
      %p75 = scmp.ne.s32.totalorder %s67, %s70
      %p76 = scmp.eq.s32.totalorder %s22, 0
      %p77 = por %p75, %p76
      %p78 = scmp.ne.s32.totalorder %s67, %s70
      %p79 = scmp.eq.s32.totalorder %s27, 3
      %p80 = por %p78, %p79
      %p81 = scmp.ne.s32.totalorder %s70, %s71
      %p82 = scmp.eq.s32.totalorder %s27, 0
      %p83 = por %p81, %p82
      %p84 = scmp.ne.s32.totalorder %s70, %s71
      %p85 = scmp.eq.s32.totalorder %s28, 3
      %p86 = por %p84, %p85
      %p88 = scmp.ne.s32.totalorder %s71, %s87
      %p89 = scmp.eq.s32.totalorder %s28, 0
      %p90 = por %p88, %p89
      %s91 = ssub.s32 %s29, %s41
      %s92 = ssub.s32 %s30, %s37
      %s93 = sor.u32 %s91, %s92
      %p94 = scmp.eq.s32.totalorder %s93, 0
      %s96 = sadd.s32 %s95, 1
      %s97 = scalar_select %p94, %s95, %s96
      %p100 = pneg %p94
      %p101 = scmp.eq.s32.totalorder %s22, 3
      %p102 = por %p100, %p101
      %p103 = scmp.ne.s32.totalorder %s95, %s98
      %p104 = scmp.eq.s32.totalorder %s22, 0
      %p105 = por %p103, %p104
      %p106 = scmp.ne.s32.totalorder %s95, %s98
      %p107 = scmp.eq.s32.totalorder %s27, 3
      %p108 = por %p106, %p107
      %p109 = scmp.ne.s32.totalorder %s98, %s99
      %p110 = scmp.eq.s32.totalorder %s27, 0
      %p111 = por %p109, %p110
      %p112 = scmp.ne.s32.totalorder %s98, %s99
      %p113 = scmp.eq.s32.totalorder %s28, 3
      %p114 = por %p112, %p113
      %p116 = scmp.ne.s32.totalorder %s99, %s115
      %p117 = scmp.eq.s32.totalorder %s28, 0
      %p118 = por %p116, %p117
      %s119 = ssub.s32 %s29, %s41
      %s120 = ssub.s32 %s30, %s37
      %s121 = sor.u32 %s119, %s120
      %p122 = scmp.eq.s32.totalorder %s121, 0
      %s124 = sadd.s32 %s123, 1
      %s125 = scalar_select %p122, %s123, %s124
      %p128 = pneg %p122
      %p129 = scmp.eq.s32.totalorder %s22, 3
      %p130 = por %p128, %p129
      %p131 = scmp.ne.s32.totalorder %s123, %s126
      %p132 = scmp.eq.s32.totalorder %s22, 0
      %p133 = por %p131, %p132
      %p134 = scmp.ne.s32.totalorder %s123, %s126
      %p135 = scmp.eq.s32.totalorder %s27, 3
      %p136 = por %p134, %p135
      %p137 = scmp.ne.s32.totalorder %s126, %s127
      %p138 = scmp.eq.s32.totalorder %s27, 0
      %p139 = por %p137, %p138
      %p140 = scmp.ne.s32.totalorder %s126, %s127
      %p141 = scmp.eq.s32.totalorder %s28, 3
      %p142 = por %p140, %p141
      %p144 = scmp.ne.s32.totalorder %s127, %s143
      %p145 = scmp.eq.s32.totalorder %s28, 0
      %p146 = por %p144, %p145
      %s148 = sadd.s32 %s147, 1
      %p151 = scmp.eq.s32.totalorder %s22, 3
      %p152 = scmp.ne.s32.totalorder %s147, %s149
      %p153 = scmp.eq.s32.totalorder %s22, 0
      %p154 = por %p152, %p153
      %p155 = scmp.ne.s32.totalorder %s147, %s149
      %p156 = scmp.eq.s32.totalorder %s27, 3
      %p157 = por %p155, %p156
      %p158 = scmp.ne.s32.totalorder %s149, %s150
      %p159 = scmp.eq.s32.totalorder %s27, 0
      %p160 = por %p158, %p159
      %p161 = scmp.ne.s32.totalorder %s149, %s150
      %p162 = scmp.eq.s32.totalorder %s28, 3
      %p163 = por %p161, %p162
      %p165 = scmp.ne.s32.totalorder %s150, %s164
      %p166 = scmp.eq.s32.totalorder %s28, 0
      %p167 = por %p165, %p166
      %s169 = sadd.s32 %s168, 1
      %p172 = scmp.eq.s32.totalorder %s22, 3
      %p173 = scmp.ne.s32.totalorder %s168, %s170
      %p174 = scmp.eq.s32.totalorder %s22, 0
      %p175 = por %p173, %p174
      %p176 = scmp.ne.s32.totalorder %s168, %s170
      %p177 = scmp.eq.s32.totalorder %s27, 3
      %p178 = por %p176, %p177
      %p179 = scmp.ne.s32.totalorder %s170, %s171
      %p180 = scmp.eq.s32.totalorder %s27, 0
      %p181 = por %p179, %p180
      %p182 = scmp.ne.s32.totalorder %s170, %s171
      %p183 = scmp.eq.s32.totalorder %s28, 3
      %p184 = por %p182, %p183
      %p186 = scmp.ne.s32.totalorder %s171, %s185
      %p187 = scmp.eq.s32.totalorder %s28, 0
      %p188 = por %p186, %p187
      %s189 = ssub.s32 %s29, %s41
      %s190 = ssub.s32 %s30, %s37
      %s191 = sor.u32 %s189, %s190
      %p192 = scmp.eq.s32.totalorder %s191, 0
      %s194 = sadd.s32 %s193, 1
      %s195 = scalar_select %p192, %s193, %s194
      %p198 = pneg %p192
      %p199 = scmp.eq.s32.totalorder %s22, 3
      %p200 = por %p198, %p199
      %p201 = scmp.ne.s32.totalorder %s193, %s196
      %p202 = scmp.eq.s32.totalorder %s22, 0
      %p203 = por %p201, %p202
      %p204 = scmp.ne.s32.totalorder %s193, %s196
      %p205 = scmp.eq.s32.totalorder %s27, 3
      %p206 = por %p204, %p205
      %p207 = scmp.ne.s32.totalorder %s196, %s197
      %p208 = scmp.eq.s32.totalorder %s27, 0
      %p209 = por %p207, %p208
      %p210 = scmp.ne.s32.totalorder %s196, %s197
      %p211 = scmp.eq.s32.totalorder %s28, 3
      %p212 = por %p210, %p211
      %p214 = scmp.ne.s32.totalorder %s197, %s213
      %p215 = scmp.eq.s32.totalorder %s28, 0
      %p216 = por %p214, %p215
      %p217 = scmp.le.s32.totalorder 1, %s22
      %p218 = scmp.lt.s32.totalorder %s22, 5
      %p219 = pnand %p217, %p218
      %p220 = pneg %p219
      // Predicated region
      $region9: #{tpu_custom_call.1} parent=5 // pred_check
        _
      $region10: #{tpu_custom_call.1} parent=5 // pred_check_branch
        %222 = sbr.rel (%p219) target = $region12
      $region11: #{tpu_custom_call.1} parent=5 // pred_region
        %s223 = ssub.s32 %s22, 1
        // Predicated region
        $region13: #{tpu_custom_call.1} parent=11 // pred_check
          %p224 = pneg %p55
        $region14: #{tpu_custom_call.1} parent=11 // pred_check_branch
          %226 = sbr.rel (%p224) target = $region16
        $region15: #{tpu_custom_call.1} parent=11 // pred_region
          %s228 = ssub.s32 16, 16
          %229 = vsyncadd [#allocation5], %s228
          %s231 = sshll.u32 %s0, 4
          %s232 = int_to_ptr.vmem [resolvable:$true] %s231
          %234 = dma.vmem_to_smem %s232, 16, [#allocation2], [#allocation5]
        $region16: #{tpu_custom_call.1} parent=11 // pred_fallthru
          _
        // Predicated region
        $region17: #{tpu_custom_call.1} parent=11 // pred_check
          %p235 = pneg %p160
        $region18: #{tpu_custom_call.1} parent=11 // pred_check_branch
          %237 = sbr.rel (%p235) target = $region20
        $region19: #{tpu_custom_call.1} parent=11 // pred_region
          _
        $region20: #{tpu_custom_call.1} parent=11 // pred_fallthru
          _
        // Predicated region
        $region21: #{tpu_custom_call.1} parent=11 // pred_check
          %p238 = pneg %p181
        $region22: #{tpu_custom_call.1} parent=11 // pred_check_branch
          %240 = sbr.rel (%p238) target = $region24
        $region23: #{tpu_custom_call.1} parent=11 // pred_region
          _
        $region24: #{tpu_custom_call.1} parent=11 // pred_fallthru
          _
      $region12: #{tpu_custom_call.1} parent=5 // pred_fallthru
        _
      %p241 = scmp.lt.s32.totalorder %s22, 4
      // Predicated region
      $region25: #{tpu_custom_call.1} parent=5 // pred_check
        %p242 = pneg %p241
      $region26: #{tpu_custom_call.1} parent=5 // pred_check_branch
        %244 = sbr.rel (%p242) target = $region28
      $region27: #{tpu_custom_call.1} parent=5 // pred_region
        // Predicated region
        $region29: #{tpu_custom_call.1} parent=27 // pred_check
          %p245 = pneg %p77
        $region30: #{tpu_custom_call.1} parent=27 // pred_check_branch
          %247 = sbr.rel (%p245) target = $region32
        $region31: #{tpu_custom_call.1} parent=27 // pred_region
          %p248 = scmp.lt.s32.totalorder %s29, 1
          %s249 = scalar_select %p248, %s29, 1
          %p250 = scmp.lt.s32.totalorder %s30, 1
          %s251 = scalar_select %p250, %s30, 1
          %s252 = smul.addr %s249, 2
          %s253 = sadd.s32 %s251, %s252
          %s254 = smul.addr %s253, 4
          %s255 = scalar_lea.vmem %s1, %s254
        $region32: #{tpu_custom_call.1} parent=27 // pred_fallthru
          _
        // Predicated region
        $region33: #{tpu_custom_call.1} parent=27 // pred_check
          %p256 = pneg %p105
        $region34: #{tpu_custom_call.1} parent=27 // pred_check_branch
          %258 = sbr.rel (%p256) target = $region36
        $region35: #{tpu_custom_call.1} parent=27 // pred_region
          %s259 = sand.u32 %s95, 1
          %s260 = scalar_lea.sflag [#allocation3], %s259
          %s261 = sand.u32 %s95, 1
          %s262 = smul.addr %s261, 4
          %s263 = scalar_lea.vmem [#allocation6], %s262
          %s265 = ssub.s32 64, 64
          %266 = vsyncadd %s260, %s265
          %s267 = smul.addr %s29, 2
          %s268 = sadd.s32 %s30, %s267
          %s269 = smul.addr %s268, 64
          %s270 = scalar_lea.hbm %s2, %s269
          %s272 = sshll.u32 %s263, 4
          %s273 = int_to_ptr.vmem [resolvable:$true] %s272
          %275 = dma.hbm_to_vmem [thread:$0]  %s270, 64, %s273, %s260
        $region36: #{tpu_custom_call.1} parent=27 // pred_fallthru
          _
        // Predicated region
        $region37: #{tpu_custom_call.1} parent=27 // pred_check
          %p276 = pneg %p133
        $region38: #{tpu_custom_call.1} parent=27 // pred_check_branch
          %278 = sbr.rel (%p276) target = $region40
        $region39: #{tpu_custom_call.1} parent=27 // pred_region
          %s279 = sand.u32 %s123, 1
          %s280 = scalar_lea.sflag [#allocation8], %s279
          %s281 = sand.u32 %s123, 1
          %s282 = smul.addr %s281, 4
          %s283 = scalar_lea.vmem [#allocation7], %s282
          %s285 = ssub.s32 64, 64
          %286 = vsyncadd %s280, %s285
          %s287 = smul.addr %s29, 2
          %s288 = sadd.s32 %s30, %s287
          %s289 = smul.addr %s288, 64
          %s290 = scalar_lea.hbm %s3, %s289
          %s292 = sshll.u32 %s283, 4
          %s293 = int_to_ptr.vmem [resolvable:$true] %s292
          %295 = dma.hbm_to_vmem [thread:$0]  %s290, 64, %s293, %s280
        $region40: #{tpu_custom_call.1} parent=27 // pred_fallthru
          _
      $region28: #{tpu_custom_call.1} parent=5 // pred_fallthru
        _
      %p296 = scmp.le.s32.totalorder 1, %s22
      %p297 = scmp.lt.s32.totalorder %s22, 5
      %p298 = pnand %p296, %p297
      %p299 = pneg %p298
      // Predicated region
      $region41: #{tpu_custom_call.1} parent=5 // pred_check
        _
      $region42: #{tpu_custom_call.1} parent=5 // pred_check_branch
        %301 = sbr.rel (%p298) target = $region44
      $region43: #{tpu_custom_call.1} parent=5 // pred_region
        %s302 = ssub.s32 %s22, 1
        // Predicated region
        $region45: #{tpu_custom_call.1} parent=43 // pred_check
          %p303 = pneg %p55
        $region46: #{tpu_custom_call.1} parent=43 // pred_check_branch
          %305 = sbr.rel (%p303) target = $region48
        $region47: #{tpu_custom_call.1} parent=43 // pred_region
          %306 = dma.done [#allocation5], 16
        $region48: #{tpu_custom_call.1} parent=43 // pred_fallthru
          _
        %s307 = sand.u32 %s98, 1
        %s308 = scalar_lea.sflag [#allocation3], %s307
        %s309 = sand.u32 %s98, 1
        %s310 = smul.addr %s309, 4
        %s311 = scalar_lea.vmem [#allocation6], %s310
        // Predicated region
        $region49: #{tpu_custom_call.1} parent=43 // pred_check
          %p312 = pneg %p111
        $region50: #{tpu_custom_call.1} parent=43 // pred_check_branch
          %314 = sbr.rel (%p312) target = $region52
        $region51: #{tpu_custom_call.1} parent=43 // pred_region
          %315 = dma.done %s308, 64
        $region52: #{tpu_custom_call.1} parent=43 // pred_fallthru
          _
        %s316 = sand.u32 %s126, 1
        %s317 = scalar_lea.sflag [#allocation8], %s316
        %s318 = sand.u32 %s126, 1
        %s319 = smul.addr %s318, 4
        %s320 = scalar_lea.vmem [#allocation7], %s319
        // Predicated region
        $region53: #{tpu_custom_call.1} parent=43 // pred_check
          %p321 = pneg %p139
        $region54: #{tpu_custom_call.1} parent=43 // pred_check_branch
          %323 = sbr.rel (%p321) target = $region56
        $region55: #{tpu_custom_call.1} parent=43 // pred_region
          %324 = dma.done %s317, 64
        $region56: #{tpu_custom_call.1} parent=43 // pred_fallthru
          _
        %325 = sfence
        %p326 = pneg %p55
        %p327 = pneg %p52
        %p328 = scmp.lt.s32.totalorder %s31, 1
        %s329 = scalar_select %p328, %s31, 1
        %p330 = scmp.lt.s32.totalorder %s32, 1
        %s331 = scalar_select %p330, %s32, 1
        %s332 = smul.addr %s329, 2
        %s333 = sadd.s32 %s331, %s332
        %s334 = smul.addr %s333, 4
        %s335 = scalar_lea.vmem %s1, %s334
        %p336 = pneg %p83
        %p337 = pneg %p80
        %s338 = sand.u32 %s98, 1
        %s339 = scalar_lea.sflag [#allocation3], %s338
        %s340 = sand.u32 %s98, 1
        %s341 = smul.addr %s340, 4
        %s342 = scalar_lea.vmem [#allocation6], %s341
        %p343 = pneg %p111
        %p344 = pneg %p108
        %s345 = sand.u32 %s126, 1
        %s346 = scalar_lea.sflag [#allocation8], %s345
        %s347 = sand.u32 %s126, 1
        %s348 = smul.addr %s347, 4
        %s349 = scalar_lea.vmem [#allocation7], %s348
        %p350 = pneg %p139
        %p351 = pneg %p136
        %p352 = pneg %p160
        %p353 = pneg %p157
        %p354 = pneg %p181
        %p355 = pneg %p178
        %p356 = pneg %p209
        %p357 = pneg %p206
        %s358 = sand.u32 %s196, 1
        %s359 = scalar_lea.sflag [#allocation4], %s358
        %s360 = sand.u32 %s196, 1
        %s361 = smul.addr %s360, 8
        %s362 = scalar_lea.vmem [#allocation9], %s361
        %p363 = scmp.lt.s32.totalorder %s31, 1
        %s364 = scalar_select %p363, %s31, 1
        %p365 = scmp.lt.s32.totalorder %s32, 1
        %s366 = scalar_select %p365, %s32, 1
        %s367 = smul.addr %s364, 2
        %s368 = sadd.s32 %s366, %s367
        %s369 = smul.addr %s368, 4
        %s370 = scalar_lea.vmem %s1, %s369
        %s371 = sld [smem:[#allocation2]]
        %s372 = sld [smem:[#allocation2 + $0x1]]
        %s373 = sld [smem:[#allocation2 + $0x2]]
        %v374 = vld [vmem:[%s370] sm:$0xf]
        %v375 = vstv %s371
        %v376 = vmul.f32 %v375, %v374
        %v377 = vld [vmem:[%s311] sm:$0xf]
        %v378 = vstv %s372
        %v379 = vmul.f32 %v378, %v377
        %v380 = vadd.f32 %v376, %v379
        %v381 = vld [vmem:[%s320] sm:$0xf]
        %v382 = vstv %s373
        %v383 = vmul.f32 %v382, %v381
        %v384 = vadd.f32 %v380, %v383
        %v385 = vxor.u32 %v384, 2147483648
        %v386 = vmul.f32 %v385, 1.442695
        %v387 = vpow.pop %v386
        %v388 = vadd.f32 %v387, 1.0
        %v389 = vrcp.pop %v388
        %v390 = vmul.f32 1.0, %v389
        %v391 = vmul.f32 %v384, %v390
        %v392 = vld [vmem:[%s4] sm:$0xff]
        %v393 = vld [vmem:[%s5] sm:$0xff]
        %395 = vset.pattern.permute.xlu0 0
        %396 = vperm.xlu0 %395, %v393
        %v397 = vpop.permute.xlu0 %396
        %vm399 = vcmask 31744
        %v401 = vsel %vm399, %v392, 0
        %vm403 = vcmask 1043456
        %v405 = vsel %vm403, %v391, 0
        %407 = vmatprep.subr.mxu0 0.0
        %408 = vmatpush1.msra.mxu0 0.0
        %409 = vmatprep.subr.mxu0 0.0
        %410 = vmatpush1.msra.mxu0 0.0
        %411 = vmatprep.subr.mxu0 0.0
        %412 = vmatpush1.msra.mxu0 0.0
        %413 = vmatprep.subr.mxu0 0.0
        %414 = vmatpush1.msra.mxu0 0.0
        %415 = vmatprep.subr.mxu0 0.0
        %416 = vmatpush1.msra.mxu0 0.0
        %417 = vmatprep.subr.mxu0 0.0
        %418 = vmatpush1.msra.mxu0 0.0
        %419 = vmatprep.subr.mxu0 0.0
        %420 = vmatpush1.msra.mxu0 0.0
        %421 = vmatprep.subr.mxu0 0.0
        %422 = vmatpush1.msra.mxu0 0.0
        %423 = vmatprep.subr.mxu0 0.0
        %424 = vmatpush1.msra.mxu0 0.0
        %425 = vmatprep.subr.mxu0 0.0
        %426 = vmatpush1.msra.mxu0 0.0
        %427 = vmatprep.subr.mxu0 0.0
        %428 = vmatpush1.msra.mxu0 0.0
        %429 = vmatprep.subr.mxu0 0.0
        %430 = vmatpush1.msra.mxu0 0.0
        %431 = vmatprep.subr.mxu0 0.0
        %432 = vmatpush1.msra.mxu0 0.0
        %433 = vmatprep.subr.mxu0 0.0
        %434 = vmatpush1.msra.mxu0 0.0
        %435 = vmatprep.subr.mxu0 0.0
        %436 = vmatpush1.msra.mxu0 0.0
        %437 = vmatprep.subr.mxu0 0.0
        %438 = vmatpush1.msra.mxu0 %v405
        %439 = vmatprep.subr.mxu0 0.0
        %440 = vmatpush2.msra.mxu0 0.0
        %441 = vmatprep.subr.mxu0 0.0
        %442 = vmatpush2.msra.mxu0 0.0
        %443 = vmatprep.subr.mxu0 0.0
        %444 = vmatpush2.msra.mxu0 0.0
        %445 = vmatprep.subr.mxu0 0.0
        %446 = vmatpush2.msra.mxu0 0.0
        %447 = vmatprep.subr.mxu0 0.0
        %448 = vmatpush2.msra.mxu0 0.0
        %449 = vmatprep.subr.mxu0 0.0
        %450 = vmatpush2.msra.mxu0 0.0
        %451 = vmatprep.subr.mxu0 0.0
        %452 = vmatpush2.msra.mxu0 0.0
        %453 = vmatprep.subr.mxu0 0.0
        %454 = vmatpush2.msra.mxu0 0.0
        %455 = vmatprep.subr.mxu0 0.0
        %456 = vmatpush2.msra.mxu0 0.0
        %457 = vmatprep.subr.mxu0 0.0
        %458 = vmatpush2.msra.mxu0 0.0
        %459 = vmatprep.subr.mxu0 0.0
        %460 = vmatpush2.msra.mxu0 0.0
        %461 = vmatprep.subr.mxu0 0.0
        %462 = vmatpush2.msra.mxu0 0.0
        %463 = vmatprep.subr.mxu0 0.0
        %464 = vmatpush2.msra.mxu0 0.0
        %465 = vmatprep.subr.mxu0 0.0
        %466 = vmatpush2.msra.mxu0 0.0
        %467 = vmatprep.subr.mxu0 0.0
        %468 = vmatpush2.msra.mxu0 0.0
        %469 = vmatprep.subr.mxu0 0.0
        %470 = vmatpush2.msra.mxu0 0.0
        %471 = vmatprep.mubr.f32.mxu0 0.0
        %472 = vmatmul.mubr.f32.gmra.mxu0 %v401
        %v473 = vpop.f32.mrf.mxu0
        %v474 = vadd.f32 %v397, %v473
        %v475 = vpop.f32.mrf.mxu0
        %476 = vdwg.mxu0
        %477 = vst [vmem:[%s362] sm:$0xff] %v474
        %s478 = sand.u32 %s196, 1
        %s479 = scalar_lea.sflag [#allocation4], %s478
        %s480 = sand.u32 %s196, 1
        %s481 = smul.addr %s480, 8
        %s482 = scalar_lea.vmem [#allocation9], %s481
        // Predicated region
        $region57: #{tpu_custom_call.1} parent=43 // pred_check
          %p483 = pneg %p206
        $region58: #{tpu_custom_call.1} parent=43 // pred_check_branch
          %485 = sbr.rel (%p483) target = $region60
        $region59: #{tpu_custom_call.1} parent=43 // pred_region
          %s487 = ssub.s32 128, 128
          %488 = vsyncadd %s479, %s487
          %s489 = smul.addr %s31, 2
          %s490 = sadd.s32 %s32, %s489
          %s491 = smul.addr %s490, 128
          %s492 = scalar_lea.hbm %s6, %s491
          %s494 = sshll.u32 %s482, 4
          %s495 = int_to_ptr.vmem [resolvable:$true] %s494
          %497 = dma.vmem_to_hbm [thread:$0]  %s495, 128, %s492, %s479
        $region60: #{tpu_custom_call.1} parent=43 // pred_fallthru
          _
      $region44: #{tpu_custom_call.1} parent=5 // pred_fallthru
        _
      %p498 = scmp.le.s32.totalorder 2, %s22
      // Predicated region
      $region61: #{tpu_custom_call.1} parent=5 // pred_check
        %p499 = pneg %p498
      $region62: #{tpu_custom_call.1} parent=5 // pred_check_branch
        %501 = sbr.rel (%p499) target = $region64
      $region63: #{tpu_custom_call.1} parent=5 // pred_region
        %s502 = ssub.s32 %s22, 2
        // Predicated region
        $region65: #{tpu_custom_call.1} parent=63 // pred_check
          %p503 = pneg %p212
        $region66: #{tpu_custom_call.1} parent=63 // pred_check_branch
          %505 = sbr.rel (%p503) target = $region68
        $region67: #{tpu_custom_call.1} parent=63 // pred_region
          %s506 = sand.u32 %s197, 1
          %s507 = scalar_lea.sflag [#allocation4], %s506
          %s508 = sand.u32 %s197, 1
          %s509 = smul.addr %s508, 8
          %s510 = scalar_lea.vmem [#allocation9], %s509
          %511 = dma.done %s507, 128
        $region68: #{tpu_custom_call.1} parent=63 // pred_fallthru
          _
      $region64: #{tpu_custom_call.1} parent=5 // pred_fallthru
        _
    $region6: #{tpu_custom_call.1} parent=1 // loop_footer
      %s26 = sadd.s32 1, %s22
    $region7: #{tpu_custom_call.1} parent=1 // loop_footer_branch
      %21 = sbr.rel target = $region3
    $region8: #{tpu_custom_call.1} parent=1 // loop_exit
      _
    %512 = vsyncpa [#allocation3], 1
    %s513 = scalar_lea.sflag [#allocation3], 1
    %514 = vsyncpa %s513, 1
    %515 = vsyncpa [#allocation8], 1
    %s516 = scalar_lea.sflag [#allocation8], 1
    %517 = vsyncpa %s516, 1
    %518 = vsyncpa [#allocation4], 1
    %s519 = scalar_lea.sflag [#allocation4], 1
    %520 = vsyncpa %s519, 1
    %521 = vsyncpa [#allocation5], 1
    %s522 = scalar_lea.sflag [#allocation5], 1
    %523 = vsyncpa %s522, 1

</llo_original>
